<compile_context>
chip_gen: v6e
topology: v6e:2x2x1
jax: 0.10.0
libtpu: 0.0.40
codegen_flags: <defaults>
</compile_context>

<pallas_src>
import jax
import jax.numpy as jnp
from jax.experimental import pallas as pl
from jax.experimental.pallas import tpu as pltpu

# (in_features, out_features) per layer, matching the PyTorch module.
LAYER_DIMS = [(18, 128), (128, 128), (128, 128), (128, 128), (128, 128),
              (128, 128), (128, 128), (128, 64), (64, 4)]
NUM_LAYERS = len(LAYER_DIMS)

LANE = 128          # lane width: pad narrow layers / output to this
OUT_DIM = 4         # real number of outputs
TILE_B = 512        # batch rows per grid step (large batches)


def _round_up(x, m):
    return ((x + m - 1) // m) * m


def mlp_kernel(x_ref, *refs):
    """refs = (w1, b1, w2, b2, ..., w9, b9, o_ref)."""
    o_ref = refs[-1]
    param_refs = refs[:-1]

    h = x_ref[...].astype(jnp.float32)
    for i in range(NUM_LAYERS):
        w = param_refs[2 * i][...]                       # bf16 (in, out)
        b = param_refs[2 * i + 1][...].astype(jnp.float32)  # f32 (1, out)
        # bf16 operands, f32 accumulation on the MXU.
        h = jnp.dot(h.astype(jnp.bfloat16), w,
                    preferred_element_type=jnp.float32) + b
        if i < NUM_LAYERS - 1:
            h = jnp.maximum(h, 0.0)          # ReLU (VPU, f32)
        else:
            h = jax.nn.sigmoid(h)            # Sigmoid (EUP exp + recip)
    o_ref[...] = h.astype(o_ref.dtype)       # lane-dense (TILE_B, 128) store


def prepare_params(params):
    """Pad tail layers to lane width 128 and cast weights to bf16.

    Input: flat [w1, b1, ..., w9, b9] with w_i (in, out) f32, b_i (1, out) f32.
    Output: same structure with layer 8 -> (128, 128)/(1, 128) and
    layer 9 -> (128, 128)/(1, 128) (zeros in the padding), weights in bf16.
    """
    kparams = []
    for i, (fan_in, fan_out) in enumerate(LAYER_DIMS):
        w = params[2 * i]
        b = params[2 * i + 1]
        in_pad = fan_in if fan_in >= LANE or i == 0 else LANE   # only tail ins pad
        out_pad = fan_out if fan_out >= LANE else LANE
        # Layer 0 keeps its 18-wide input (block == full dim is legal);
        # layers whose fan_in < 128 (the 64->4 layer) get zero-padded rows to
        # match the previous layer's padded 128-wide output.
        if i > 0 and fan_in < LANE:
            in_pad = LANE
        w = jnp.pad(w, ((0, in_pad - fan_in), (0, out_pad - fan_out)))
        b = jnp.pad(b, ((0, 0), (0, out_pad - fan_out)))
        kparams.append(w.astype(jnp.bfloat16))
        kparams.append(b.astype(jnp.float32))
    return kparams


def baseline_mlp(x, kparams, *, tile_b=TILE_B):
    """x: (B, 18) f32; kparams: output of prepare_params(). Returns (B, 4) f32."""
    batch = x.shape[0]
    in_dim = x.shape[1]
    # Don't over-pad tiny batches, but keep sublane (8) alignment.
    tile_b = min(tile_b, _round_up(batch, 8))
    b_pad = _round_up(batch, tile_b)
    if b_pad != batch:
        x = jnp.pad(x, ((0, b_pad - batch), (0, 0)))

    grid = (pl.cdiv(b_pad, tile_b),)

    in_specs = [pl.BlockSpec((tile_b, in_dim), lambda i: (i, 0))]
    for p in kparams:
        # Constant index_map -> weights/biases stay resident in VMEM.
        in_specs.append(pl.BlockSpec(p.shape, lambda i: (0, 0)))
    out_specs = pl.BlockSpec((tile_b, LANE), lambda i: (i, 0))

    flops = 2 * b_pad * sum(fi * fo for fi, fo in LAYER_DIMS)
    param_bytes = sum(int(p.size) * p.dtype.itemsize for p in kparams)
    cost = pl.CostEstimate(
        flops=flops,
        transcendentals=b_pad * LANE,                      # final sigmoid exps
        bytes_accessed=b_pad * (in_dim + LANE) * 4 + param_bytes,
    )

    out = pl.pallas_call(
        mlp_kernel,
        out_shape=jax.ShapeDtypeStruct((b_pad, LANE), jnp.float32),
        grid=grid,
        in_specs=in_specs,
        out_specs=out_specs,
        compiler_params=pltpu.CompilerParams(
            dimension_semantics=("parallel",)),
        cost_estimate=cost,
    )(x, *kparams)
    return out[:batch, :OUT_DIM]


def init_params(key):
    """Deterministic init; weights are (in, out), biases (1, out), all f32."""
    params = []
    for (fan_in, fan_out) in LAYER_DIMS:
        key, kw, kb = jax.random.split(key, 3)
        bound = 1.0 / jnp.sqrt(jnp.float32(fan_in))
        w = jax.random.uniform(kw, (fan_in, fan_out), jnp.float32, -bound, bound)
        b = jax.random.uniform(kb, (1, fan_out), jnp.float32, -bound, bound)
        params.extend([w, b])
    return params


def reference_mlp(x, params):
    """Pure-JAX f32 reference for correctness."""
    h = x
    for i in range(NUM_LAYERS):
        w, b = params[2 * i], params[2 * i + 1]
        h = h @ w + b
        h = jnp.maximum(h, 0.0) if i < NUM_LAYERS - 1 else jax.nn.sigmoid(h)
    return h


if __name__ == "__main__":
    key = jax.random.PRNGKey(0)
    key, kx = jax.random.split(key)
    params = init_params(key)
    kparams = prepare_params(params)

    batch = 8
    x = jax.random.normal(kx, (batch, 18), jnp.float32)

    out = jax.block_until_ready(baseline_mlp(x, kparams))
    ref = reference_mlp(x, params)

    assert out.shape == (batch, 4)
    # bf16 matmul operands with f32 accumulation -> loosen tolerance vs f32 ref.
    assert jnp.allclose(out, ref, atol=2e-2, rtol=2e-2), float(
        jnp.max(jnp.abs(out - ref)))
    print("KERNEL_OK")
</pallas_src>

<mosaic_0001>
module attributes {stable_mosaic.version = 11 : i64} {
  func.func @mlp_kernel(%arg0: i32, %arg1: memref<8x18xf32, #tpu.memory_space<vmem>>, %arg2: memref<18x128xbf16, #tpu.memory_space<vmem>>, %arg3: memref<1x128xf32, #tpu.memory_space<vmem>>, %arg4: memref<128x128xbf16, #tpu.memory_space<vmem>>, %arg5: memref<1x128xf32, #tpu.memory_space<vmem>>, %arg6: memref<128x128xbf16, #tpu.memory_space<vmem>>, %arg7: memref<1x128xf32, #tpu.memory_space<vmem>>, %arg8: memref<128x128xbf16, #tpu.memory_space<vmem>>, %arg9: memref<1x128xf32, #tpu.memory_space<vmem>>, %arg10: memref<128x128xbf16, #tpu.memory_space<vmem>>, %arg11: memref<1x128xf32, #tpu.memory_space<vmem>>, %arg12: memref<128x128xbf16, #tpu.memory_space<vmem>>, %arg13: memref<1x128xf32, #tpu.memory_space<vmem>>, %arg14: memref<128x128xbf16, #tpu.memory_space<vmem>>, %arg15: memref<1x128xf32, #tpu.memory_space<vmem>>, %arg16: memref<128x128xbf16, #tpu.memory_space<vmem>>, %arg17: memref<1x128xf32, #tpu.memory_space<vmem>>, %arg18: memref<128x128xbf16, #tpu.memory_space<vmem>>, %arg19: memref<1x128xf32, #tpu.memory_space<vmem>>, %arg20: memref<8x128xf32, #tpu.memory_space<vmem>>) attributes {dimension_semantics = [#tpu.dimension_semantics<parallel>], iteration_bounds = array<i64: 1>, scalar_prefetch = 0 : i64, scratch_operands = 0 : i64, tpu.core_type = #tpu.core_type<tc>, window_params = [{transform_indices = @transform_0, window_bounds = array<i64: 8, 18>}, {pipeline_mode = #tpu.pipeline_mode<synchronous>, transform_indices = @transform_1, window_bounds = array<i64: 18, 128>}, {pipeline_mode = #tpu.pipeline_mode<synchronous>, transform_indices = @transform_2, window_bounds = array<i64: 1, 128>}, {pipeline_mode = #tpu.pipeline_mode<synchronous>, transform_indices = @transform_3, window_bounds = array<i64: 128, 128>}, {pipeline_mode = #tpu.pipeline_mode<synchronous>, transform_indices = @transform_4, window_bounds = array<i64: 1, 128>}, {pipeline_mode = #tpu.pipeline_mode<synchronous>, transform_indices = @transform_5, window_bounds = array<i64: 128, 128>}, {pipeline_mode = #tpu.pipeline_mode<synchronous>, transform_indices = @transform_6, window_bounds = array<i64: 1, 128>}, {pipeline_mode = #tpu.pipeline_mode<synchronous>, transform_indices = @transform_7, window_bounds = array<i64: 128, 128>}, {pipeline_mode = #tpu.pipeline_mode<synchronous>, transform_indices = @transform_8, window_bounds = array<i64: 1, 128>}, {pipeline_mode = #tpu.pipeline_mode<synchronous>, transform_indices = @transform_9, window_bounds = array<i64: 128, 128>}, {pipeline_mode = #tpu.pipeline_mode<synchronous>, transform_indices = @transform_10, window_bounds = array<i64: 1, 128>}, {pipeline_mode = #tpu.pipeline_mode<synchronous>, transform_indices = @transform_11, window_bounds = array<i64: 128, 128>}, {pipeline_mode = #tpu.pipeline_mode<synchronous>, transform_indices = @transform_12, window_bounds = array<i64: 1, 128>}, {pipeline_mode = #tpu.pipeline_mode<synchronous>, transform_indices = @transform_13, window_bounds = array<i64: 128, 128>}, {pipeline_mode = #tpu.pipeline_mode<synchronous>, transform_indices = @transform_14, window_bounds = array<i64: 1, 128>}, {pipeline_mode = #tpu.pipeline_mode<synchronous>, transform_indices = @transform_15, window_bounds = array<i64: 128, 128>}, {pipeline_mode = #tpu.pipeline_mode<synchronous>, transform_indices = @transform_16, window_bounds = array<i64: 1, 128>}, {pipeline_mode = #tpu.pipeline_mode<synchronous>, transform_indices = @transform_17, window_bounds = array<i64: 128, 128>}, {pipeline_mode = #tpu.pipeline_mode<synchronous>, transform_indices = @transform_18, window_bounds = array<i64: 1, 128>}, {transform_indices = @transform_19, window_bounds = array<i64: 8, 128>}]} {
    %c0 = arith.constant 0 : index
    %c0_0 = arith.constant 0 : index
    %0 = vector.load %arg1[%c0, %c0_0] : memref<8x18xf32, #tpu.memory_space<vmem>>, vector<8x18xf32>
    %c0_1 = arith.constant 0 : index
    %c0_2 = arith.constant 0 : index
    %1 = vector.load %arg2[%c0_1, %c0_2] : memref<18x128xbf16, #tpu.memory_space<vmem>>, vector<18x128xbf16>
    %c0_3 = arith.constant 0 : index
    %c0_4 = arith.constant 0 : index
    %2 = vector.load %arg3[%c0_3, %c0_4] : memref<1x128xf32, #tpu.memory_space<vmem>>, vector<1x128xf32>
    %3 = arith.truncf %0 : vector<8x18xf32> to vector<8x18xbf16>
    %cst = arith.constant dense<0.000000e+00> : vector<8x128xf32>
    %4 = tpu.matmul %3, %1, %cst {dimension_numbers = #tpu.dot_dimension_numbers<[1], [0], [0], [1], [0, 0, 1, 1], [], []>} : vector<8x18xbf16>, vector<18x128xbf16>, vector<8x128xf32> -> vector<8x128xf32>
    %5 = vector.broadcast %2 : vector<1x128xf32> to vector<8x128xf32>
    %6 = arith.addf %4, %5 : vector<8x128xf32>
    %cst_5 = arith.constant 0.000000e+00 : f32
    %7 = vector.broadcast %cst_5 : f32 to vector<8x128xf32>
    %8 = arith.maximumf %6, %7 : vector<8x128xf32>
    %c0_6 = arith.constant 0 : index
    %c0_7 = arith.constant 0 : index
    %9 = vector.load %arg4[%c0_6, %c0_7] : memref<128x128xbf16, #tpu.memory_space<vmem>>, vector<128x128xbf16>
    %c0_8 = arith.constant 0 : index
    %c0_9 = arith.constant 0 : index
    %10 = vector.load %arg5[%c0_8, %c0_9] : memref<1x128xf32, #tpu.memory_space<vmem>>, vector<1x128xf32>
    %11 = arith.truncf %8 : vector<8x128xf32> to vector<8x128xbf16>
    %cst_10 = arith.constant dense<0.000000e+00> : vector<8x128xf32>
    %12 = tpu.matmul %11, %9, %cst_10 {dimension_numbers = #tpu.dot_dimension_numbers<[1], [0], [0], [1], [0, 0, 1, 1], [], []>} : vector<8x128xbf16>, vector<128x128xbf16>, vector<8x128xf32> -> vector<8x128xf32>
    %13 = vector.broadcast %10 : vector<1x128xf32> to vector<8x128xf32>
    %14 = arith.addf %12, %13 : vector<8x128xf32>
    %cst_11 = arith.constant 0.000000e+00 : f32
    %15 = vector.broadcast %cst_11 : f32 to vector<8x128xf32>
    %16 = arith.maximumf %14, %15 : vector<8x128xf32>
    %c0_12 = arith.constant 0 : index
    %c0_13 = arith.constant 0 : index
    %17 = vector.load %arg6[%c0_12, %c0_13] : memref<128x128xbf16, #tpu.memory_space<vmem>>, vector<128x128xbf16>
    %c0_14 = arith.constant 0 : index
    %c0_15 = arith.constant 0 : index
    %18 = vector.load %arg7[%c0_14, %c0_15] : memref<1x128xf32, #tpu.memory_space<vmem>>, vector<1x128xf32>
    %19 = arith.truncf %16 : vector<8x128xf32> to vector<8x128xbf16>
    %cst_16 = arith.constant dense<0.000000e+00> : vector<8x128xf32>
    %20 = tpu.matmul %19, %17, %cst_16 {dimension_numbers = #tpu.dot_dimension_numbers<[1], [0], [0], [1], [0, 0, 1, 1], [], []>} : vector<8x128xbf16>, vector<128x128xbf16>, vector<8x128xf32> -> vector<8x128xf32>
    %21 = vector.broadcast %18 : vector<1x128xf32> to vector<8x128xf32>
    %22 = arith.addf %20, %21 : vector<8x128xf32>
    %cst_17 = arith.constant 0.000000e+00 : f32
    %23 = vector.broadcast %cst_17 : f32 to vector<8x128xf32>
    %24 = arith.maximumf %22, %23 : vector<8x128xf32>
    %c0_18 = arith.constant 0 : index
    %c0_19 = arith.constant 0 : index
    %25 = vector.load %arg8[%c0_18, %c0_19] : memref<128x128xbf16, #tpu.memory_space<vmem>>, vector<128x128xbf16>
    %c0_20 = arith.constant 0 : index
    %c0_21 = arith.constant 0 : index
    %26 = vector.load %arg9[%c0_20, %c0_21] : memref<1x128xf32, #tpu.memory_space<vmem>>, vector<1x128xf32>
    %27 = arith.truncf %24 : vector<8x128xf32> to vector<8x128xbf16>
    %cst_22 = arith.constant dense<0.000000e+00> : vector<8x128xf32>
    %28 = tpu.matmul %27, %25, %cst_22 {dimension_numbers = #tpu.dot_dimension_numbers<[1], [0], [0], [1], [0, 0, 1, 1], [], []>} : vector<8x128xbf16>, vector<128x128xbf16>, vector<8x128xf32> -> vector<8x128xf32>
    %29 = vector.broadcast %26 : vector<1x128xf32> to vector<8x128xf32>
    %30 = arith.addf %28, %29 : vector<8x128xf32>
    %cst_23 = arith.constant 0.000000e+00 : f32
    %31 = vector.broadcast %cst_23 : f32 to vector<8x128xf32>
    %32 = arith.maximumf %30, %31 : vector<8x128xf32>
    %c0_24 = arith.constant 0 : index
    %c0_25 = arith.constant 0 : index
    %33 = vector.load %arg10[%c0_24, %c0_25] : memref<128x128xbf16, #tpu.memory_space<vmem>>, vector<128x128xbf16>
    %c0_26 = arith.constant 0 : index
    %c0_27 = arith.constant 0 : index
    %34 = vector.load %arg11[%c0_26, %c0_27] : memref<1x128xf32, #tpu.memory_space<vmem>>, vector<1x128xf32>
    %35 = arith.truncf %32 : vector<8x128xf32> to vector<8x128xbf16>
    %cst_28 = arith.constant dense<0.000000e+00> : vector<8x128xf32>
    %36 = tpu.matmul %35, %33, %cst_28 {dimension_numbers = #tpu.dot_dimension_numbers<[1], [0], [0], [1], [0, 0, 1, 1], [], []>} : vector<8x128xbf16>, vector<128x128xbf16>, vector<8x128xf32> -> vector<8x128xf32>
    %37 = vector.broadcast %34 : vector<1x128xf32> to vector<8x128xf32>
    %38 = arith.addf %36, %37 : vector<8x128xf32>
    %cst_29 = arith.constant 0.000000e+00 : f32
    %39 = vector.broadcast %cst_29 : f32 to vector<8x128xf32>
    %40 = arith.maximumf %38, %39 : vector<8x128xf32>
    %c0_30 = arith.constant 0 : index
    %c0_31 = arith.constant 0 : index
    %41 = vector.load %arg12[%c0_30, %c0_31] : memref<128x128xbf16, #tpu.memory_space<vmem>>, vector<128x128xbf16>
    %c0_32 = arith.constant 0 : index
    %c0_33 = arith.constant 0 : index
    %42 = vector.load %arg13[%c0_32, %c0_33] : memref<1x128xf32, #tpu.memory_space<vmem>>, vector<1x128xf32>
    %43 = arith.truncf %40 : vector<8x128xf32> to vector<8x128xbf16>
    %cst_34 = arith.constant dense<0.000000e+00> : vector<8x128xf32>
    %44 = tpu.matmul %43, %41, %cst_34 {dimension_numbers = #tpu.dot_dimension_numbers<[1], [0], [0], [1], [0, 0, 1, 1], [], []>} : vector<8x128xbf16>, vector<128x128xbf16>, vector<8x128xf32> -> vector<8x128xf32>
    %45 = vector.broadcast %42 : vector<1x128xf32> to vector<8x128xf32>
    %46 = arith.addf %44, %45 : vector<8x128xf32>
    %cst_35 = arith.constant 0.000000e+00 : f32
    %47 = vector.broadcast %cst_35 : f32 to vector<8x128xf32>
    %48 = arith.maximumf %46, %47 : vector<8x128xf32>
    %c0_36 = arith.constant 0 : index
    %c0_37 = arith.constant 0 : index
    %49 = vector.load %arg14[%c0_36, %c0_37] : memref<128x128xbf16, #tpu.memory_space<vmem>>, vector<128x128xbf16>
    %c0_38 = arith.constant 0 : index
    %c0_39 = arith.constant 0 : index
    %50 = vector.load %arg15[%c0_38, %c0_39] : memref<1x128xf32, #tpu.memory_space<vmem>>, vector<1x128xf32>
    %51 = arith.truncf %48 : vector<8x128xf32> to vector<8x128xbf16>
    %cst_40 = arith.constant dense<0.000000e+00> : vector<8x128xf32>
    %52 = tpu.matmul %51, %49, %cst_40 {dimension_numbers = #tpu.dot_dimension_numbers<[1], [0], [0], [1], [0, 0, 1, 1], [], []>} : vector<8x128xbf16>, vector<128x128xbf16>, vector<8x128xf32> -> vector<8x128xf32>
    %53 = vector.broadcast %50 : vector<1x128xf32> to vector<8x128xf32>
    %54 = arith.addf %52, %53 : vector<8x128xf32>
    %cst_41 = arith.constant 0.000000e+00 : f32
    %55 = vector.broadcast %cst_41 : f32 to vector<8x128xf32>
    %56 = arith.maximumf %54, %55 : vector<8x128xf32>
    %c0_42 = arith.constant 0 : index
    %c0_43 = arith.constant 0 : index
    %57 = vector.load %arg16[%c0_42, %c0_43] : memref<128x128xbf16, #tpu.memory_space<vmem>>, vector<128x128xbf16>
    %c0_44 = arith.constant 0 : index
    %c0_45 = arith.constant 0 : index
    %58 = vector.load %arg17[%c0_44, %c0_45] : memref<1x128xf32, #tpu.memory_space<vmem>>, vector<1x128xf32>
    %59 = arith.truncf %56 : vector<8x128xf32> to vector<8x128xbf16>
    %cst_46 = arith.constant dense<0.000000e+00> : vector<8x128xf32>
    %60 = tpu.matmul %59, %57, %cst_46 {dimension_numbers = #tpu.dot_dimension_numbers<[1], [0], [0], [1], [0, 0, 1, 1], [], []>} : vector<8x128xbf16>, vector<128x128xbf16>, vector<8x128xf32> -> vector<8x128xf32>
    %61 = vector.broadcast %58 : vector<1x128xf32> to vector<8x128xf32>
    %62 = arith.addf %60, %61 : vector<8x128xf32>
    %cst_47 = arith.constant 0.000000e+00 : f32
    %63 = vector.broadcast %cst_47 : f32 to vector<8x128xf32>
    %64 = arith.maximumf %62, %63 : vector<8x128xf32>
    %c0_48 = arith.constant 0 : index
    %c0_49 = arith.constant 0 : index
    %65 = vector.load %arg18[%c0_48, %c0_49] : memref<128x128xbf16, #tpu.memory_space<vmem>>, vector<128x128xbf16>
    %c0_50 = arith.constant 0 : index
    %c0_51 = arith.constant 0 : index
    %66 = vector.load %arg19[%c0_50, %c0_51] : memref<1x128xf32, #tpu.memory_space<vmem>>, vector<1x128xf32>
    %67 = arith.truncf %64 : vector<8x128xf32> to vector<8x128xbf16>
    %cst_52 = arith.constant dense<0.000000e+00> : vector<8x128xf32>
    %68 = tpu.matmul %67, %65, %cst_52 {dimension_numbers = #tpu.dot_dimension_numbers<[1], [0], [0], [1], [0, 0, 1, 1], [], []>} : vector<8x128xbf16>, vector<128x128xbf16>, vector<8x128xf32> -> vector<8x128xf32>
    %69 = vector.broadcast %66 : vector<1x128xf32> to vector<8x128xf32>
    %70 = arith.addf %68, %69 : vector<8x128xf32>
    %71 = arith.negf %70 : vector<8x128xf32>
    %72 = math.exp %71 : vector<8x128xf32>
    %cst_53 = arith.constant 1.000000e+00 : f32
    %73 = vector.broadcast %cst_53 : f32 to vector<8x128xf32>
    %74 = arith.addf %73, %72 : vector<8x128xf32>
    %75 = arith.divf %73, %74 : vector<8x128xf32>
    %c0_54 = arith.constant 0 : index
    %c0_55 = arith.constant 0 : index
    %76 = vector.load %arg20[%c0_54, %c0_55] : memref<8x128xf32, #tpu.memory_space<vmem>>, vector<8x128xf32>
    tpu.vector_store %arg20[%c0_54, %c0_55], %75 {strides = array<i32>} : memref<8x128xf32, #tpu.memory_space<vmem>>, vector<8x128xf32>,
    return
  }
  func.func @transform_0(%arg0: i32) -> (i32, i32) {
    %c0_i32 = arith.constant 0 : i32
    %c0_i32_0 = arith.constant 0 : i32
    return %arg0, %c0_i32 : i32, i32
  }
  func.func @transform_1(%arg0: i32) -> (i32, i32) {
    %c0_i32 = arith.constant 0 : i32
    %c0_i32_0 = arith.constant 0 : i32
    %c0_i32_1 = arith.constant 0 : i32
    return %c0_i32, %c0_i32_0 : i32, i32
  }
  func.func @transform_2(%arg0: i32) -> (i32, i32) {
    %c0_i32 = arith.constant 0 : i32
    %c0_i32_0 = arith.constant 0 : i32
    %c0_i32_1 = arith.constant 0 : i32
    return %c0_i32, %c0_i32_0 : i32, i32
  }
  func.func @transform_3(%arg0: i32) -> (i32, i32) {
    %c0_i32 = arith.constant 0 : i32
    %c0_i32_0 = arith.constant 0 : i32
    %c0_i32_1 = arith.constant 0 : i32
    return %c0_i32, %c0_i32_0 : i32, i32
  }
  func.func @transform_4(%arg0: i32) -> (i32, i32) {
    %c0_i32 = arith.constant 0 : i32
    %c0_i32_0 = arith.constant 0 : i32
    %c0_i32_1 = arith.constant 0 : i32
    return %c0_i32, %c0_i32_0 : i32, i32
  }
  func.func @transform_5(%arg0: i32) -> (i32, i32) {
    %c0_i32 = arith.constant 0 : i32
    %c0_i32_0 = arith.constant 0 : i32
    %c0_i32_1 = arith.constant 0 : i32
    return %c0_i32, %c0_i32_0 : i32, i32
  }
  func.func @transform_6(%arg0: i32) -> (i32, i32) {
    %c0_i32 = arith.constant 0 : i32
    %c0_i32_0 = arith.constant 0 : i32
    %c0_i32_1 = arith.constant 0 : i32
    return %c0_i32, %c0_i32_0 : i32, i32
  }
  func.func @transform_7(%arg0: i32) -> (i32, i32) {
    %c0_i32 = arith.constant 0 : i32
    %c0_i32_0 = arith.constant 0 : i32
    %c0_i32_1 = arith.constant 0 : i32
    return %c0_i32, %c0_i32_0 : i32, i32
  }
  func.func @transform_8(%arg0: i32) -> (i32, i32) {
    %c0_i32 = arith.constant 0 : i32
    %c0_i32_0 = arith.constant 0 : i32
    %c0_i32_1 = arith.constant 0 : i32
    return %c0_i32, %c0_i32_0 : i32, i32
  }
  func.func @transform_9(%arg0: i32) -> (i32, i32) {
    %c0_i32 = arith.constant 0 : i32
    %c0_i32_0 = arith.constant 0 : i32
    %c0_i32_1 = arith.constant 0 : i32
    return %c0_i32, %c0_i32_0 : i32, i32
  }
  func.func @transform_10(%arg0: i32) -> (i32, i32) {
    %c0_i32 = arith.constant 0 : i32
    %c0_i32_0 = arith.constant 0 : i32
    %c0_i32_1 = arith.constant 0 : i32
    return %c0_i32, %c0_i32_0 : i32, i32
  }
  func.func @transform_11(%arg0: i32) -> (i32, i32) {
    %c0_i32 = arith.constant 0 : i32
    %c0_i32_0 = arith.constant 0 : i32
    %c0_i32_1 = arith.constant 0 : i32
    return %c0_i32, %c0_i32_0 : i32, i32
  }
  func.func @transform_12(%arg0: i32) -> (i32, i32) {
    %c0_i32 = arith.constant 0 : i32
    %c0_i32_0 = arith.constant 0 : i32
    %c0_i32_1 = arith.constant 0 : i32
    return %c0_i32, %c0_i32_0 : i32, i32
  }
  func.func @transform_13(%arg0: i32) -> (i32, i32) {
    %c0_i32 = arith.constant 0 : i32
    %c0_i32_0 = arith.constant 0 : i32
    %c0_i32_1 = arith.constant 0 : i32
    return %c0_i32, %c0_i32_0 : i32, i32
  }
  func.func @transform_14(%arg0: i32) -> (i32, i32) {
    %c0_i32 = arith.constant 0 : i32
    %c0_i32_0 = arith.constant 0 : i32
    %c0_i32_1 = arith.constant 0 : i32
    return %c0_i32, %c0_i32_0 : i32, i32
  }
  func.func @transform_15(%arg0: i32) -> (i32, i32) {
    %c0_i32 = arith.constant 0 : i32
    %c0_i32_0 = arith.constant 0 : i32
    %c0_i32_1 = arith.constant 0 : i32
    return %c0_i32, %c0_i32_0 : i32, i32
  }
  func.func @transform_16(%arg0: i32) -> (i32, i32) {
    %c0_i32 = arith.constant 0 : i32
    %c0_i32_0 = arith.constant 0 : i32
    %c0_i32_1 = arith.constant 0 : i32
    return %c0_i32, %c0_i32_0 : i32, i32
  }
  func.func @transform_17(%arg0: i32) -> (i32, i32) {
    %c0_i32 = arith.constant 0 : i32
    %c0_i32_0 = arith.constant 0 : i32
    %c0_i32_1 = arith.constant 0 : i32
    return %c0_i32, %c0_i32_0 : i32, i32
  }
  func.func @transform_18(%arg0: i32) -> (i32, i32) {
    %c0_i32 = arith.constant 0 : i32
    %c0_i32_0 = arith.constant 0 : i32
    %c0_i32_1 = arith.constant 0 : i32
    return %c0_i32, %c0_i32_0 : i32, i32
  }
  func.func @transform_19(%arg0: i32) -> (i32, i32) {
    %c0_i32 = arith.constant 0 : i32
    %c0_i32_0 = arith.constant 0 : i32
    return %arg0, %c0_i32 : i32, i32
  }
}

</mosaic_0001>

<llo_original>
// kernel: tpu_custom_call.1
$region0: #{tpu_custom_call.1}
  #allocation0 [shape = 'u32[]', space=smem, size = 0x4, offset = 0x4, fixed_abs, tag = 'smem constant byte address 0x4 - core index']
  #allocation1 [shape = 'u32[144,128]{1,0:T(1,128)}', space=vmem, size = 0x12000, scoped, tag = 'internal scratch']
  %s0 = inlined_call_operand.hbm [shape: f32[8,18], index: 0, kind: input, shape index: {}]
  %s1 = inlined_call_operand.hbm [shape: bf16[18,128], index: 1, kind: input, shape index: {}]
  %s2 = inlined_call_operand.vmem [shape: f32[1,128], index: 2, kind: input, shape index: {}]
  %s3 = inlined_call_operand.hbm [shape: bf16[128,128], index: 3, kind: input, shape index: {}]
  %s4 = inlined_call_operand.vmem [shape: f32[1,128], index: 4, kind: input, shape index: {}]
  %s5 = inlined_call_operand.hbm [shape: bf16[128,128], index: 5, kind: input, shape index: {}]
  %s6 = inlined_call_operand.vmem [shape: f32[1,128], index: 6, kind: input, shape index: {}]
  %s7 = inlined_call_operand.hbm [shape: bf16[128,128], index: 7, kind: input, shape index: {}]
  %s8 = inlined_call_operand.vmem [shape: f32[1,128], index: 8, kind: input, shape index: {}]
  %s9 = inlined_call_operand.hbm [shape: bf16[128,128], index: 9, kind: input, shape index: {}]
  %s10 = inlined_call_operand.vmem [shape: f32[1,128], index: 10, kind: input, shape index: {}]
  %s11 = inlined_call_operand.hbm [shape: bf16[128,128], index: 11, kind: input, shape index: {}]
  %s12 = inlined_call_operand.vmem [shape: f32[1,128], index: 12, kind: input, shape index: {}]
  %s13 = inlined_call_operand.hbm [shape: bf16[128,128], index: 13, kind: input, shape index: {}]
  %s14 = inlined_call_operand.vmem [shape: f32[1,128], index: 14, kind: input, shape index: {}]
  %s15 = inlined_call_operand.hbm [shape: bf16[128,128], index: 15, kind: input, shape index: {}]
  %s16 = inlined_call_operand.vmem [shape: f32[1,128], index: 16, kind: input, shape index: {}]
  %s17 = inlined_call_operand.hbm [shape: bf16[128,128], index: 17, kind: input, shape index: {}]
  %s18 = inlined_call_operand.vmem [shape: f32[1,128], index: 18, kind: input, shape index: {}]
  %s19 = inlined_call_operand.hbm [shape: f32[8,128], index: 19, kind: output, shape index: {}]
  %s20 = sld [smem:[#allocation0]]
  $region126: #{tpu_custom_call.1} parent=0
    _
  %s22 = ssub.s32 1, %s20
  %s23 = scalar_select 0, %s22, %s20
  $region1: #{tpu_custom_call.1} parent=0
    #allocation2 [shape = 'u8[4096]{0}', space=vmem, size = 0x1000, scoped, tag = 'input window, operand 0, single buffered']
    #allocation3 [shape = 's32[1]{0}', space=sflag, size = 0x4, scoped, tag = 'scoped memory for tpu_custom_call.1']
    #allocation4 [shape = 's32[1]{0}', space=sflag, size = 0x4, scoped, tag = 'scoped memory for tpu_custom_call.1']
    #allocation5 [shape = 'u8[6144]{0}', space=vmem, size = 0x1800, scoped, tag = 'input window, operand 1, single buffered']
    #allocation6 [shape = 's32[1]{0}', space=sflag, size = 0x4, scoped, tag = 'scoped memory for tpu_custom_call.1']
    #allocation7 [shape = 'u8[32768]{0}', space=vmem, size = 0x8000, scoped, tag = 'input window, operand 3, single buffered']
    #allocation8 [shape = 'u8[32768]{0}', space=vmem, size = 0x8000, scoped, tag = 'input window, operand 5, single buffered']
    #allocation9 [shape = 's32[1]{0}', space=sflag, size = 0x4, scoped, tag = 'scoped memory for tpu_custom_call.1']
    #allocation10 [shape = 'u8[32768]{0}', space=vmem, size = 0x8000, scoped, tag = 'input window, operand 7, single buffered']
    #allocation11 [shape = 'u8[32768]{0}', space=vmem, size = 0x8000, scoped, tag = 'input window, operand 9, single buffered']
    #allocation12 [shape = 's32[1]{0}', space=sflag, size = 0x4, scoped, tag = 'scoped memory for tpu_custom_call.1']
    #allocation13 [shape = 'u8[32768]{0}', space=vmem, size = 0x8000, scoped, tag = 'input window, operand 11, single buffered']
    #allocation14 [shape = 'u8[32768]{0}', space=vmem, size = 0x8000, scoped, tag = 'input window, operand 13, single buffered']
    #allocation15 [shape = 's32[1]{0}', space=sflag, size = 0x4, scoped, tag = 'scoped memory for tpu_custom_call.1']
    #allocation16 [shape = 'u8[32768]{0}', space=vmem, size = 0x8000, scoped, tag = 'input window, operand 15, single buffered']
    #allocation17 [shape = 'u8[32768]{0}', space=vmem, size = 0x8000, scoped, tag = 'input window, operand 17, single buffered']
    #allocation18 [shape = 's32[1]{0}', space=sflag, size = 0x4, scoped, tag = 'scoped memory for tpu_custom_call.1']
    #allocation19 [shape = 'u8[4096]{0}', space=vmem, size = 0x1000, scoped, tag = 'output window, operand 0, single buffered']
    %24 = vsyncpa [#allocation3], 0
    %25 = vsyncpa [#allocation6], 0
    %26 = vsyncpa [#allocation9], 0
    %27 = vsyncpa [#allocation12], 0
    %28 = vsyncpa [#allocation15], 0
    %29 = vsyncpa [#allocation18], 0
    %30 = vsyncpa [#allocation4], 0
    // Predicated region
    $region2: #{tpu_custom_call.1} parent=1 // pred_check
      _
    $region3: #{tpu_custom_call.1} parent=1 // pred_check_branch
      %32 = sbr.rel (0) target = $region5
    $region4: #{tpu_custom_call.1} parent=1 // pred_region
      %s34 = ssub.s32 128, 128
      %35 = vsyncadd [#allocation3], %s34
      %s37 = sshll.u32 [#allocation2], 4
      %s38 = int_to_ptr.vmem [resolvable:$true] %s37
      %40 = dma.hbm_to_vmem [thread:$0]  %s0, 128, %s38, [#allocation3]
    $region5: #{tpu_custom_call.1} parent=1 // pred_fallthru
      _
    // Predicated region
    $region6: #{tpu_custom_call.1} parent=1 // pred_check
      _
    $region7: #{tpu_custom_call.1} parent=1 // pred_check_branch
      %42 = sbr.rel (0) target = $region9
    $region8: #{tpu_custom_call.1} parent=1 // pred_region
      %s44 = ssub.s32 192, 192
      %45 = vsyncadd [#allocation6], %s44
      %s46 = sshll.u32 [#allocation5], 4
      %s47 = int_to_ptr.vmem [resolvable:$true] %s46
      %52 = dma.hbm_to_vmem [thread:$0]  %s1, 192, %s47, [#allocation6], 64, 64, 4
    $region9: #{tpu_custom_call.1} parent=1 // pred_fallthru
      _
    // Predicated region
    $region10: #{tpu_custom_call.1} parent=1 // pred_check
      _
    $region11: #{tpu_custom_call.1} parent=1 // pred_check_branch
      %54 = sbr.rel (0) target = $region13
    $region12: #{tpu_custom_call.1} parent=1 // pred_region
      _
    $region13: #{tpu_custom_call.1} parent=1 // pred_fallthru
      _
    // Predicated region
    $region14: #{tpu_custom_call.1} parent=1 // pred_check
      _
    $region15: #{tpu_custom_call.1} parent=1 // pred_check_branch
      %56 = sbr.rel (0) target = $region17
    $region16: #{tpu_custom_call.1} parent=1 // pred_region
      %s58 = ssub.s32 1024, 1024
      %59 = vsyncadd [#allocation6], %s58
      %s60 = sshll.u32 [#allocation7], 4
      %s61 = int_to_ptr.vmem [resolvable:$true] %s60
      %66 = dma.hbm_to_vmem [thread:$0]  %s3, 1024, %s61, [#allocation6], 64, 64, 4
    $region17: #{tpu_custom_call.1} parent=1 // pred_fallthru
      _
    // Predicated region
    $region18: #{tpu_custom_call.1} parent=1 // pred_check
      _
    $region19: #{tpu_custom_call.1} parent=1 // pred_check_branch
      %68 = sbr.rel (0) target = $region21
    $region20: #{tpu_custom_call.1} parent=1 // pred_region
      _
    $region21: #{tpu_custom_call.1} parent=1 // pred_fallthru
      _
    // Predicated region
    $region22: #{tpu_custom_call.1} parent=1 // pred_check
      _
    $region23: #{tpu_custom_call.1} parent=1 // pred_check_branch
      %70 = sbr.rel (0) target = $region25
    $region24: #{tpu_custom_call.1} parent=1 // pred_region
      %s72 = ssub.s32 1024, 1024
      %73 = vsyncadd [#allocation9], %s72
      %s74 = sshll.u32 [#allocation8], 4
      %s75 = int_to_ptr.vmem [resolvable:$true] %s74
      %80 = dma.hbm_to_vmem [thread:$0]  %s5, 1024, %s75, [#allocation9], 64, 64, 4
    $region25: #{tpu_custom_call.1} parent=1 // pred_fallthru
      _
    // Predicated region
    $region26: #{tpu_custom_call.1} parent=1 // pred_check
      _
    $region27: #{tpu_custom_call.1} parent=1 // pred_check_branch
      %82 = sbr.rel (0) target = $region29
    $region28: #{tpu_custom_call.1} parent=1 // pred_region
      _
    $region29: #{tpu_custom_call.1} parent=1 // pred_fallthru
      _
    // Predicated region
    $region30: #{tpu_custom_call.1} parent=1 // pred_check
      _
    $region31: #{tpu_custom_call.1} parent=1 // pred_check_branch
      %84 = sbr.rel (0) target = $region33
    $region32: #{tpu_custom_call.1} parent=1 // pred_region
      %s86 = ssub.s32 1024, 1024
      %87 = vsyncadd [#allocation9], %s86
      %s88 = sshll.u32 [#allocation10], 4
      %s89 = int_to_ptr.vmem [resolvable:$true] %s88
      %94 = dma.hbm_to_vmem [thread:$0]  %s7, 1024, %s89, [#allocation9], 64, 64, 4
    $region33: #{tpu_custom_call.1} parent=1 // pred_fallthru
      _
    // Predicated region
    $region34: #{tpu_custom_call.1} parent=1 // pred_check
      _
    $region35: #{tpu_custom_call.1} parent=1 // pred_check_branch
      %96 = sbr.rel (0) target = $region37
    $region36: #{tpu_custom_call.1} parent=1 // pred_region
      _
    $region37: #{tpu_custom_call.1} parent=1 // pred_fallthru
      _
    // Predicated region
    $region38: #{tpu_custom_call.1} parent=1 // pred_check
      _
    $region39: #{tpu_custom_call.1} parent=1 // pred_check_branch
      %98 = sbr.rel (0) target = $region41
    $region40: #{tpu_custom_call.1} parent=1 // pred_region
      %s100 = ssub.s32 1024, 1024
      %101 = vsyncadd [#allocation12], %s100
      %s102 = sshll.u32 [#allocation11], 4
      %s103 = int_to_ptr.vmem [resolvable:$true] %s102
      %108 = dma.hbm_to_vmem [thread:$0]  %s9, 1024, %s103, [#allocation12], 64, 64, 4
    $region41: #{tpu_custom_call.1} parent=1 // pred_fallthru
      _
    // Predicated region
    $region42: #{tpu_custom_call.1} parent=1 // pred_check
      _
    $region43: #{tpu_custom_call.1} parent=1 // pred_check_branch
      %110 = sbr.rel (0) target = $region45
    $region44: #{tpu_custom_call.1} parent=1 // pred_region
      _
    $region45: #{tpu_custom_call.1} parent=1 // pred_fallthru
      _
    // Predicated region
    $region46: #{tpu_custom_call.1} parent=1 // pred_check
      _
    $region47: #{tpu_custom_call.1} parent=1 // pred_check_branch
      %112 = sbr.rel (0) target = $region49
    $region48: #{tpu_custom_call.1} parent=1 // pred_region
      %s114 = ssub.s32 1024, 1024
      %115 = vsyncadd [#allocation12], %s114
      %s116 = sshll.u32 [#allocation13], 4
      %s117 = int_to_ptr.vmem [resolvable:$true] %s116
      %122 = dma.hbm_to_vmem [thread:$0]  %s11, 1024, %s117, [#allocation12], 64, 64, 4
    $region49: #{tpu_custom_call.1} parent=1 // pred_fallthru
      _
    // Predicated region
    $region50: #{tpu_custom_call.1} parent=1 // pred_check
      _
    $region51: #{tpu_custom_call.1} parent=1 // pred_check_branch
      %124 = sbr.rel (0) target = $region53
    $region52: #{tpu_custom_call.1} parent=1 // pred_region
      _
    $region53: #{tpu_custom_call.1} parent=1 // pred_fallthru
      _
    // Predicated region
    $region54: #{tpu_custom_call.1} parent=1 // pred_check
      _
    $region55: #{tpu_custom_call.1} parent=1 // pred_check_branch
      %126 = sbr.rel (0) target = $region57
    $region56: #{tpu_custom_call.1} parent=1 // pred_region
      %s128 = ssub.s32 1024, 1024
      %129 = vsyncadd [#allocation15], %s128
      %s130 = sshll.u32 [#allocation14], 4
      %s131 = int_to_ptr.vmem [resolvable:$true] %s130
      %136 = dma.hbm_to_vmem [thread:$0]  %s13, 1024, %s131, [#allocation15], 64, 64, 4
    $region57: #{tpu_custom_call.1} parent=1 // pred_fallthru
      _
    // Predicated region
    $region58: #{tpu_custom_call.1} parent=1 // pred_check
      _
    $region59: #{tpu_custom_call.1} parent=1 // pred_check_branch
      %138 = sbr.rel (0) target = $region61
    $region60: #{tpu_custom_call.1} parent=1 // pred_region
      _
    $region61: #{tpu_custom_call.1} parent=1 // pred_fallthru
      _
    // Predicated region
    $region62: #{tpu_custom_call.1} parent=1 // pred_check
      _
    $region63: #{tpu_custom_call.1} parent=1 // pred_check_branch
      %140 = sbr.rel (0) target = $region65
    $region64: #{tpu_custom_call.1} parent=1 // pred_region
      %s142 = ssub.s32 1024, 1024
      %143 = vsyncadd [#allocation15], %s142
      %s144 = sshll.u32 [#allocation16], 4
      %s145 = int_to_ptr.vmem [resolvable:$true] %s144
      %150 = dma.hbm_to_vmem [thread:$0]  %s15, 1024, %s145, [#allocation15], 64, 64, 4
    $region65: #{tpu_custom_call.1} parent=1 // pred_fallthru
      _
    // Predicated region
    $region66: #{tpu_custom_call.1} parent=1 // pred_check
      _
    $region67: #{tpu_custom_call.1} parent=1 // pred_check_branch
      %152 = sbr.rel (0) target = $region69
    $region68: #{tpu_custom_call.1} parent=1 // pred_region
      _
    $region69: #{tpu_custom_call.1} parent=1 // pred_fallthru
      _
    // Predicated region
    $region70: #{tpu_custom_call.1} parent=1 // pred_check
      _
    $region71: #{tpu_custom_call.1} parent=1 // pred_check_branch
      %154 = sbr.rel (0) target = $region73
    $region72: #{tpu_custom_call.1} parent=1 // pred_region
      %s156 = ssub.s32 1024, 1024
      %157 = vsyncadd [#allocation18], %s156
      %s158 = sshll.u32 [#allocation17], 4
      %s159 = int_to_ptr.vmem [resolvable:$true] %s158
      %164 = dma.hbm_to_vmem [thread:$0]  %s17, 1024, %s159, [#allocation18], 64, 64, 4
    $region73: #{tpu_custom_call.1} parent=1 // pred_fallthru
      _
    // Predicated region
    $region74: #{tpu_custom_call.1} parent=1 // pred_check
      _
    $region75: #{tpu_custom_call.1} parent=1 // pred_check_branch
      %166 = sbr.rel (0) target = $region77
    $region76: #{tpu_custom_call.1} parent=1 // pred_region
      _
    $region77: #{tpu_custom_call.1} parent=1 // pred_fallthru
      _
    // Predicated region
    $region78: #{tpu_custom_call.1} parent=1 // pred_check
      _
    $region79: #{tpu_custom_call.1} parent=1 // pred_check_branch
      %168 = sbr.rel (0) target = $region81
    $region80: #{tpu_custom_call.1} parent=1 // pred_region
      %169 = dma.done [#allocation3], 128
    $region81: #{tpu_custom_call.1} parent=1 // pred_fallthru
      _
    // Predicated region
    $region82: #{tpu_custom_call.1} parent=1 // pred_check
      _
    $region83: #{tpu_custom_call.1} parent=1 // pred_check_branch
      %171 = sbr.rel (0) target = $region85
    $region84: #{tpu_custom_call.1} parent=1 // pred_region
      %172 = dma.done [#allocation6], 192
    $region85: #{tpu_custom_call.1} parent=1 // pred_fallthru
      _
    // Predicated region
    $region86: #{tpu_custom_call.1} parent=1 // pred_check
      _
    $region87: #{tpu_custom_call.1} parent=1 // pred_check_branch
      %174 = sbr.rel (0) target = $region89
    $region88: #{tpu_custom_call.1} parent=1 // pred_region
      %175 = dma.done [#allocation6], 1024
    $region89: #{tpu_custom_call.1} parent=1 // pred_fallthru
      _
    // Predicated region
    $region90: #{tpu_custom_call.1} parent=1 // pred_check
      _
    $region91: #{tpu_custom_call.1} parent=1 // pred_check_branch
      %177 = sbr.rel (0) target = $region93
    $region92: #{tpu_custom_call.1} parent=1 // pred_region
      %178 = dma.done [#allocation9], 1024
    $region93: #{tpu_custom_call.1} parent=1 // pred_fallthru
      _
    // Predicated region
    $region94: #{tpu_custom_call.1} parent=1 // pred_check
      _
    $region95: #{tpu_custom_call.1} parent=1 // pred_check_branch
      %180 = sbr.rel (0) target = $region97
    $region96: #{tpu_custom_call.1} parent=1 // pred_region
      %181 = dma.done [#allocation9], 1024
    $region97: #{tpu_custom_call.1} parent=1 // pred_fallthru
      _
    // Predicated region
    $region98: #{tpu_custom_call.1} parent=1 // pred_check
      _
    $region99: #{tpu_custom_call.1} parent=1 // pred_check_branch
      %183 = sbr.rel (0) target = $region101
    $region100: #{tpu_custom_call.1} parent=1 // pred_region
      %184 = dma.done [#allocation12], 1024
    $region101: #{tpu_custom_call.1} parent=1 // pred_fallthru
      _
    // Predicated region
    $region102: #{tpu_custom_call.1} parent=1 // pred_check
      _
    $region103: #{tpu_custom_call.1} parent=1 // pred_check_branch
      %186 = sbr.rel (0) target = $region105
    $region104: #{tpu_custom_call.1} parent=1 // pred_region
      %187 = dma.done [#allocation12], 1024
    $region105: #{tpu_custom_call.1} parent=1 // pred_fallthru
      _
    // Predicated region
    $region106: #{tpu_custom_call.1} parent=1 // pred_check
      _
    $region107: #{tpu_custom_call.1} parent=1 // pred_check_branch
      %189 = sbr.rel (0) target = $region109
    $region108: #{tpu_custom_call.1} parent=1 // pred_region
      %190 = dma.done [#allocation15], 1024
    $region109: #{tpu_custom_call.1} parent=1 // pred_fallthru
      _
    // Predicated region
    $region110: #{tpu_custom_call.1} parent=1 // pred_check
      _
    $region111: #{tpu_custom_call.1} parent=1 // pred_check_branch
      %192 = sbr.rel (0) target = $region113
    $region112: #{tpu_custom_call.1} parent=1 // pred_region
      %193 = dma.done [#allocation15], 1024
    $region113: #{tpu_custom_call.1} parent=1 // pred_fallthru
      _
    // Predicated region
    $region114: #{tpu_custom_call.1} parent=1 // pred_check
      _
    $region115: #{tpu_custom_call.1} parent=1 // pred_check_branch
      %195 = sbr.rel (0) target = $region117
    $region116: #{tpu_custom_call.1} parent=1 // pred_region
      %196 = dma.done [#allocation18], 1024
    $region117: #{tpu_custom_call.1} parent=1 // pred_fallthru
      _
    %v198 = vld [vmem:[#allocation2] sm:$0xff]
    %v199 = vld [vmem:[#allocation5] sm:$0xf]
    %v200 = vld [vmem:[#allocation5 + $0x4] sm:$0xf]
    %v201 = vld [vmem:[#allocation5 + $0x8] sm:$0x1]
    %v202 = vld [vmem:[%s2] sm:$0x1]
    %v203 = vpack.c.bf16 %v198, %v198
    %v205 = vlaneseq
    %v206 = vshrl.u32 %v205, 7
    %v207 = vsub.s32 0, %v206
    %v208 = vrot.slane %v202, %v207
    %v213 = vunpack.c.l.b16 %v199
    %v214 = vunpack.c.l.b16 %v200
    %v215 = vunpack.c.l.b16 %v201
    %v216 = vpack.c.b16 %v214, %v213
    %v217 = vpack.c.b16 %v215, %v215
    %vm219 = vcmask 146432
    %v221 = vsel %vm219, %v203, 0
    %vm223 = vcmask 1040384
    %v225 = vsel %vm223, %v217, 0
    %227 = vmatprep.subr.bf16.mxu0 0
    %228 = vmatpush1.bf16.msra.mxu0 0
    %229 = vmatprep.subr.bf16.mxu0 0
    %230 = vmatpush1.bf16.msra.mxu0 0
    %231 = vmatprep.subr.bf16.mxu0 0
    %232 = vmatpush1.bf16.msra.mxu0 0
    %233 = vmatprep.subr.bf16.mxu0 0
    %234 = vmatpush1.bf16.msra.mxu0 0
    %235 = vmatprep.subr.bf16.mxu0 0
    %236 = vmatpush1.bf16.msra.mxu0 0
    %237 = vmatprep.subr.bf16.mxu0 0
    %238 = vmatpush1.bf16.msra.mxu0 0
    %239 = vmatprep.subr.bf16.mxu0 0
    %240 = vmatpush1.bf16.msra.mxu0 %v225
    %241 = vmatprep.subr.bf16.mxu0 0
    %242 = vmatpush1.bf16.msra.mxu0 %v216
    %243 = vmatprep.subr.bf16.mxu0 0
    %244 = vmatpush2.bf16.msra.mxu0 0
    %245 = vmatprep.subr.bf16.mxu0 0
    %246 = vmatpush2.bf16.msra.mxu0 0
    %247 = vmatprep.subr.bf16.mxu0 0
    %248 = vmatpush2.bf16.msra.mxu0 0
    %249 = vmatprep.subr.bf16.mxu0 0
    %250 = vmatpush2.bf16.msra.mxu0 0
    %251 = vmatprep.subr.bf16.mxu0 0
    %252 = vmatpush2.bf16.msra.mxu0 0
    %253 = vmatprep.subr.bf16.mxu0 0
    %254 = vmatpush2.bf16.msra.mxu0 0
    %255 = vmatprep.subr.bf16.mxu0 0
    %256 = vmatpush2.bf16.msra.mxu0 0
    %257 = vmatprep.subr.bf16.mxu0 0
    %258 = vmatpush2.bf16.msra.mxu0 0
    %259 = vmatprep.mubr.bf16.mxu0 0
    %260 = vmatmul.mubr.bf16.gmra.mxu0 %v221
    %v261 = vpop.f32.mrf.mxu0
    %v262 = vadd.f32 %v208, %v261
    %v263 = vpop.f32.mrf.mxu0
    %v264 = vpop.f32.mrf.mxu0
    %v265 = vpop.f32.mrf.mxu0
    %266 = vdwg.mxu0
    %v267 = vmax.f32 %v262, 0.0
    %v268 = vld [vmem:[#allocation7] sm:$0xf]
    %v269 = vld [vmem:[#allocation7 + $0x4] sm:$0xf]
    %v270 = vld [vmem:[#allocation7 + $0x8] sm:$0xf]
    %v271 = vld [vmem:[#allocation7 + $0xc] sm:$0xf]
    %v272 = vld [vmem:[#allocation7 + $0x10] sm:$0xf]
    %v273 = vld [vmem:[#allocation7 + $0x14] sm:$0xf]
    %v274 = vld [vmem:[#allocation7 + $0x18] sm:$0xf]
    %v275 = vld [vmem:[#allocation7 + $0x1c] sm:$0xf]
    %v276 = vld [vmem:[#allocation7 + $0x20] sm:$0xf]
    %v277 = vld [vmem:[#allocation7 + $0x24] sm:$0xf]
    %v278 = vld [vmem:[#allocation7 + $0x28] sm:$0xf]
    %v279 = vld [vmem:[#allocation7 + $0x2c] sm:$0xf]
    %v280 = vld [vmem:[#allocation7 + $0x30] sm:$0xf]
    %v281 = vld [vmem:[#allocation7 + $0x34] sm:$0xf]
    %v282 = vld [vmem:[#allocation7 + $0x38] sm:$0xf]
    %v283 = vld [vmem:[#allocation7 + $0x3c] sm:$0xf]
    %v284 = vld [vmem:[%s4] sm:$0x1]
    %v285 = vpack.c.bf16 %v267, %v267
    %v287 = vlaneseq
    %v288 = vshrl.u32 %v287, 7
    %v289 = vsub.s32 0, %v288
    %v290 = vrot.slane %v284, %v289
    %v308 = vunpack.c.l.b16 %v268
    %v309 = vunpack.c.l.b16 %v269
    %v310 = vunpack.c.l.b16 %v270
    %v311 = vunpack.c.l.b16 %v271
    %v312 = vunpack.c.l.b16 %v272
    %v313 = vunpack.c.l.b16 %v273
    %v314 = vunpack.c.l.b16 %v274
    %v315 = vunpack.c.l.b16 %v275
    %v316 = vunpack.c.l.b16 %v276
    %v317 = vunpack.c.l.b16 %v277
    %v318 = vunpack.c.l.b16 %v278
    %v319 = vunpack.c.l.b16 %v279
    %v320 = vunpack.c.l.b16 %v280
    %v321 = vunpack.c.l.b16 %v281
    %v322 = vunpack.c.l.b16 %v282
    %v323 = vunpack.c.l.b16 %v283
    %v324 = vpack.c.b16 %v309, %v308
    %v325 = vpack.c.b16 %v311, %v310
    %v326 = vpack.c.b16 %v313, %v312
    %v327 = vpack.c.b16 %v315, %v314
    %v328 = vpack.c.b16 %v317, %v316
    %v329 = vpack.c.b16 %v319, %v318
    %v330 = vpack.c.b16 %v321, %v320
    %v331 = vpack.c.b16 %v323, %v322
    %340 = vmatprep.subr.bf16.mxu0 0
    %341 = vmatpush1.bf16.msra.mxu0 %v331
    %342 = vmatprep.subr.bf16.mxu0 0
    %343 = vmatpush1.bf16.msra.mxu0 %v330
    %344 = vmatprep.subr.bf16.mxu0 0
    %345 = vmatpush1.bf16.msra.mxu0 %v329
    %346 = vmatprep.subr.bf16.mxu0 0
    %347 = vmatpush1.bf16.msra.mxu0 %v328
    %348 = vmatprep.subr.bf16.mxu0 0
    %349 = vmatpush1.bf16.msra.mxu0 %v327
    %350 = vmatprep.subr.bf16.mxu0 0
    %351 = vmatpush1.bf16.msra.mxu0 %v326
    %352 = vmatprep.subr.bf16.mxu0 0
    %353 = vmatpush1.bf16.msra.mxu0 %v325
    %354 = vmatprep.subr.bf16.mxu0 0
    %355 = vmatpush1.bf16.msra.mxu0 %v324
    %356 = vmatprep.subr.bf16.mxu0 0
    %357 = vmatpush2.bf16.msra.mxu0 0
    %358 = vmatprep.subr.bf16.mxu0 0
    %359 = vmatpush2.bf16.msra.mxu0 0
    %360 = vmatprep.subr.bf16.mxu0 0
    %361 = vmatpush2.bf16.msra.mxu0 0
    %362 = vmatprep.subr.bf16.mxu0 0
    %363 = vmatpush2.bf16.msra.mxu0 0
    %364 = vmatprep.subr.bf16.mxu0 0
    %365 = vmatpush2.bf16.msra.mxu0 0
    %366 = vmatprep.subr.bf16.mxu0 0
    %367 = vmatpush2.bf16.msra.mxu0 0
    %368 = vmatprep.subr.bf16.mxu0 0
    %369 = vmatpush2.bf16.msra.mxu0 0
    %370 = vmatprep.subr.bf16.mxu0 0
    %371 = vmatpush2.bf16.msra.mxu0 0
    %372 = vmatprep.mubr.bf16.mxu0 0
    %373 = vmatmul.mubr.bf16.gmra.mxu0 %v285
    %v374 = vpop.f32.mrf.mxu0
    %v375 = vadd.f32 %v290, %v374
    %v376 = vpop.f32.mrf.mxu0
    %v377 = vpop.f32.mrf.mxu0
    %v378 = vpop.f32.mrf.mxu0
    %379 = vdwg.mxu0
    %v380 = vmax.f32 %v375, 0.0
    %v381 = vld [vmem:[#allocation8] sm:$0xf]
    %v382 = vld [vmem:[#allocation8 + $0x4] sm:$0xf]
    %v383 = vld [vmem:[#allocation8 + $0x8] sm:$0xf]
    %v384 = vld [vmem:[#allocation8 + $0xc] sm:$0xf]
    %v385 = vld [vmem:[#allocation8 + $0x10] sm:$0xf]
    %v386 = vld [vmem:[#allocation8 + $0x14] sm:$0xf]
    %v387 = vld [vmem:[#allocation8 + $0x18] sm:$0xf]
    %v388 = vld [vmem:[#allocation8 + $0x1c] sm:$0xf]
    %v389 = vld [vmem:[#allocation8 + $0x20] sm:$0xf]
    %v390 = vld [vmem:[#allocation8 + $0x24] sm:$0xf]
    %v391 = vld [vmem:[#allocation8 + $0x28] sm:$0xf]
    %v392 = vld [vmem:[#allocation8 + $0x2c] sm:$0xf]
    %v393 = vld [vmem:[#allocation8 + $0x30] sm:$0xf]
    %v394 = vld [vmem:[#allocation8 + $0x34] sm:$0xf]
    %v395 = vld [vmem:[#allocation8 + $0x38] sm:$0xf]
    %v396 = vld [vmem:[#allocation8 + $0x3c] sm:$0xf]
    %v397 = vld [vmem:[%s6] sm:$0x1]
    %v398 = vpack.c.bf16 %v380, %v380
    %v400 = vlaneseq
    %v401 = vshrl.u32 %v400, 7
    %v402 = vsub.s32 0, %v401
    %v403 = vrot.slane %v397, %v402
    %v421 = vunpack.c.l.b16 %v381
    %v422 = vunpack.c.l.b16 %v382
    %v423 = vunpack.c.l.b16 %v383
    %v424 = vunpack.c.l.b16 %v384
    %v425 = vunpack.c.l.b16 %v385
    %v426 = vunpack.c.l.b16 %v386
    %v427 = vunpack.c.l.b16 %v387
    %v428 = vunpack.c.l.b16 %v388
    %v429 = vunpack.c.l.b16 %v389
    %v430 = vunpack.c.l.b16 %v390
    %v431 = vunpack.c.l.b16 %v391
    %v432 = vunpack.c.l.b16 %v392
    %v433 = vunpack.c.l.b16 %v393
    %v434 = vunpack.c.l.b16 %v394
    %v435 = vunpack.c.l.b16 %v395
    %v436 = vunpack.c.l.b16 %v396
    %v437 = vpack.c.b16 %v422, %v421
    %v438 = vpack.c.b16 %v424, %v423
    %v439 = vpack.c.b16 %v426, %v425
    %v440 = vpack.c.b16 %v428, %v427
    %v441 = vpack.c.b16 %v430, %v429
    %v442 = vpack.c.b16 %v432, %v431
    %v443 = vpack.c.b16 %v434, %v433
    %v444 = vpack.c.b16 %v436, %v435
    %453 = vmatprep.subr.bf16.mxu0 0
    %454 = vmatpush1.bf16.msra.mxu0 %v444
    %455 = vmatprep.subr.bf16.mxu0 0
    %456 = vmatpush1.bf16.msra.mxu0 %v443
    %457 = vmatprep.subr.bf16.mxu0 0
    %458 = vmatpush1.bf16.msra.mxu0 %v442
    %459 = vmatprep.subr.bf16.mxu0 0
    %460 = vmatpush1.bf16.msra.mxu0 %v441
    %461 = vmatprep.subr.bf16.mxu0 0
    %462 = vmatpush1.bf16.msra.mxu0 %v440
    %463 = vmatprep.subr.bf16.mxu0 0
    %464 = vmatpush1.bf16.msra.mxu0 %v439
    %465 = vmatprep.subr.bf16.mxu0 0
    %466 = vmatpush1.bf16.msra.mxu0 %v438
    %467 = vmatprep.subr.bf16.mxu0 0
    %468 = vmatpush1.bf16.msra.mxu0 %v437
    %469 = vmatprep.subr.bf16.mxu0 0
    %470 = vmatpush2.bf16.msra.mxu0 0
    %471 = vmatprep.subr.bf16.mxu0 0
    %472 = vmatpush2.bf16.msra.mxu0 0
    %473 = vmatprep.subr.bf16.mxu0 0
    %474 = vmatpush2.bf16.msra.mxu0 0
    %475 = vmatprep.subr.bf16.mxu0 0
    %476 = vmatpush2.bf16.msra.mxu0 0
    %477 = vmatprep.subr.bf16.mxu0 0
    %478 = vmatpush2.bf16.msra.mxu0 0
    %479 = vmatprep.subr.bf16.mxu0 0
    %480 = vmatpush2.bf16.msra.mxu0 0
    %481 = vmatprep.subr.bf16.mxu0 0
    %482 = vmatpush2.bf16.msra.mxu0 0
    %483 = vmatprep.subr.bf16.mxu0 0
    %484 = vmatpush2.bf16.msra.mxu0 0
    %485 = vmatprep.mubr.bf16.mxu0 0
    %486 = vmatmul.mubr.bf16.gmra.mxu0 %v398
    %v487 = vpop.f32.mrf.mxu0
    %v488 = vadd.f32 %v403, %v487
    %v489 = vpop.f32.mrf.mxu0
    %v490 = vpop.f32.mrf.mxu0
    %v491 = vpop.f32.mrf.mxu0
    %492 = vdwg.mxu0
    %v493 = vmax.f32 %v488, 0.0
    %v494 = vld [vmem:[#allocation10] sm:$0xf]
    %v495 = vld [vmem:[#allocation10 + $0x4] sm:$0xf]
    %v496 = vld [vmem:[#allocation10 + $0x8] sm:$0xf]
    %v497 = vld [vmem:[#allocation10 + $0xc] sm:$0xf]
    %v498 = vld [vmem:[#allocation10 + $0x10] sm:$0xf]
    %v499 = vld [vmem:[#allocation10 + $0x14] sm:$0xf]
    %v500 = vld [vmem:[#allocation10 + $0x18] sm:$0xf]
    %v501 = vld [vmem:[#allocation10 + $0x1c] sm:$0xf]
    %v502 = vld [vmem:[#allocation10 + $0x20] sm:$0xf]
    %v503 = vld [vmem:[#allocation10 + $0x24] sm:$0xf]
    %v504 = vld [vmem:[#allocation10 + $0x28] sm:$0xf]
    %v505 = vld [vmem:[#allocation10 + $0x2c] sm:$0xf]
    %v506 = vld [vmem:[#allocation10 + $0x30] sm:$0xf]
    %v507 = vld [vmem:[#allocation10 + $0x34] sm:$0xf]
    %v508 = vld [vmem:[#allocation10 + $0x38] sm:$0xf]
    %v509 = vld [vmem:[#allocation10 + $0x3c] sm:$0xf]
    %v510 = vld [vmem:[%s8] sm:$0x1]
    %v511 = vpack.c.bf16 %v493, %v493
    %v513 = vlaneseq
    %v514 = vshrl.u32 %v513, 7
    %v515 = vsub.s32 0, %v514
    %v516 = vrot.slane %v510, %v515
    %v534 = vunpack.c.l.b16 %v494
    %v535 = vunpack.c.l.b16 %v495
    %v536 = vunpack.c.l.b16 %v496
    %v537 = vunpack.c.l.b16 %v497
    %v538 = vunpack.c.l.b16 %v498
    %v539 = vunpack.c.l.b16 %v499
    %v540 = vunpack.c.l.b16 %v500
    %v541 = vunpack.c.l.b16 %v501
    %v542 = vunpack.c.l.b16 %v502
    %v543 = vunpack.c.l.b16 %v503
    %v544 = vunpack.c.l.b16 %v504
    %v545 = vunpack.c.l.b16 %v505
    %v546 = vunpack.c.l.b16 %v506
    %v547 = vunpack.c.l.b16 %v507
    %v548 = vunpack.c.l.b16 %v508
    %v549 = vunpack.c.l.b16 %v509
    %v550 = vpack.c.b16 %v535, %v534
    %v551 = vpack.c.b16 %v537, %v536
    %v552 = vpack.c.b16 %v539, %v538
    %v553 = vpack.c.b16 %v541, %v540
    %v554 = vpack.c.b16 %v543, %v542
    %v555 = vpack.c.b16 %v545, %v544
    %v556 = vpack.c.b16 %v547, %v546
    %v557 = vpack.c.b16 %v549, %v548
    %566 = vmatprep.subr.bf16.mxu0 0
    %567 = vmatpush1.bf16.msra.mxu0 %v557
    %568 = vmatprep.subr.bf16.mxu0 0
    %569 = vmatpush1.bf16.msra.mxu0 %v556
    %570 = vmatprep.subr.bf16.mxu0 0
    %571 = vmatpush1.bf16.msra.mxu0 %v555
    %572 = vmatprep.subr.bf16.mxu0 0
    %573 = vmatpush1.bf16.msra.mxu0 %v554
    %574 = vmatprep.subr.bf16.mxu0 0
    %575 = vmatpush1.bf16.msra.mxu0 %v553
    %576 = vmatprep.subr.bf16.mxu0 0
    %577 = vmatpush1.bf16.msra.mxu0 %v552
    %578 = vmatprep.subr.bf16.mxu0 0
    %579 = vmatpush1.bf16.msra.mxu0 %v551
    %580 = vmatprep.subr.bf16.mxu0 0
    %581 = vmatpush1.bf16.msra.mxu0 %v550
    %582 = vmatprep.subr.bf16.mxu0 0
    %583 = vmatpush2.bf16.msra.mxu0 0
    %584 = vmatprep.subr.bf16.mxu0 0
    %585 = vmatpush2.bf16.msra.mxu0 0
    %586 = vmatprep.subr.bf16.mxu0 0
    %587 = vmatpush2.bf16.msra.mxu0 0
    %588 = vmatprep.subr.bf16.mxu0 0
    %589 = vmatpush2.bf16.msra.mxu0 0
    %590 = vmatprep.subr.bf16.mxu0 0
    %591 = vmatpush2.bf16.msra.mxu0 0
    %592 = vmatprep.subr.bf16.mxu0 0
    %593 = vmatpush2.bf16.msra.mxu0 0
    %594 = vmatprep.subr.bf16.mxu0 0
    %595 = vmatpush2.bf16.msra.mxu0 0
    %596 = vmatprep.subr.bf16.mxu0 0
    %597 = vmatpush2.bf16.msra.mxu0 0
    %598 = vmatprep.mubr.bf16.mxu0 0
    %599 = vmatmul.mubr.bf16.gmra.mxu0 %v511
    %v600 = vpop.f32.mrf.mxu0
    %v601 = vadd.f32 %v516, %v600
    %v602 = vpop.f32.mrf.mxu0
    %v603 = vpop.f32.mrf.mxu0
    %v604 = vpop.f32.mrf.mxu0
    %605 = vdwg.mxu0
    %v606 = vmax.f32 %v601, 0.0
    %v607 = vld [vmem:[#allocation11] sm:$0xf]
    %v608 = vld [vmem:[#allocation11 + $0x4] sm:$0xf]
    %v609 = vld [vmem:[#allocation11 + $0x8] sm:$0xf]
    %v610 = vld [vmem:[#allocation11 + $0xc] sm:$0xf]
    %v611 = vld [vmem:[#allocation11 + $0x10] sm:$0xf]
    %v612 = vld [vmem:[#allocation11 + $0x14] sm:$0xf]
    %v613 = vld [vmem:[#allocation11 + $0x18] sm:$0xf]
    %v614 = vld [vmem:[#allocation11 + $0x1c] sm:$0xf]
    %v615 = vld [vmem:[#allocation11 + $0x20] sm:$0xf]
    %v616 = vld [vmem:[#allocation11 + $0x24] sm:$0xf]
    %v617 = vld [vmem:[#allocation11 + $0x28] sm:$0xf]
    %v618 = vld [vmem:[#allocation11 + $0x2c] sm:$0xf]
    %v619 = vld [vmem:[#allocation11 + $0x30] sm:$0xf]
    %v620 = vld [vmem:[#allocation11 + $0x34] sm:$0xf]
    %v621 = vld [vmem:[#allocation11 + $0x38] sm:$0xf]
    %v622 = vld [vmem:[#allocation11 + $0x3c] sm:$0xf]
    %v623 = vld [vmem:[%s10] sm:$0x1]
    %v624 = vpack.c.bf16 %v606, %v606
    %v626 = vlaneseq
    %v627 = vshrl.u32 %v626, 7
    %v628 = vsub.s32 0, %v627
    %v629 = vrot.slane %v623, %v628
    %v647 = vunpack.c.l.b16 %v607
    %v648 = vunpack.c.l.b16 %v608
    %v649 = vunpack.c.l.b16 %v609
    %v650 = vunpack.c.l.b16 %v610
    %v651 = vunpack.c.l.b16 %v611
    %v652 = vunpack.c.l.b16 %v612
    %v653 = vunpack.c.l.b16 %v613
    %v654 = vunpack.c.l.b16 %v614
    %v655 = vunpack.c.l.b16 %v615
    %v656 = vunpack.c.l.b16 %v616
    %v657 = vunpack.c.l.b16 %v617
    %v658 = vunpack.c.l.b16 %v618
    %v659 = vunpack.c.l.b16 %v619
    %v660 = vunpack.c.l.b16 %v620
    %v661 = vunpack.c.l.b16 %v621
    %v662 = vunpack.c.l.b16 %v622
    %v663 = vpack.c.b16 %v648, %v647
    %v664 = vpack.c.b16 %v650, %v649
    %v665 = vpack.c.b16 %v652, %v651
    %v666 = vpack.c.b16 %v654, %v653
    %v667 = vpack.c.b16 %v656, %v655
    %v668 = vpack.c.b16 %v658, %v657
    %v669 = vpack.c.b16 %v660, %v659
    %v670 = vpack.c.b16 %v662, %v661
    %679 = vmatprep.subr.bf16.mxu0 0
    %680 = vmatpush1.bf16.msra.mxu0 %v670
    %681 = vmatprep.subr.bf16.mxu0 0
    %682 = vmatpush1.bf16.msra.mxu0 %v669
    %683 = vmatprep.subr.bf16.mxu0 0
    %684 = vmatpush1.bf16.msra.mxu0 %v668
    %685 = vmatprep.subr.bf16.mxu0 0
    %686 = vmatpush1.bf16.msra.mxu0 %v667
    %687 = vmatprep.subr.bf16.mxu0 0
    %688 = vmatpush1.bf16.msra.mxu0 %v666
    %689 = vmatprep.subr.bf16.mxu0 0
    %690 = vmatpush1.bf16.msra.mxu0 %v665
    %691 = vmatprep.subr.bf16.mxu0 0
    %692 = vmatpush1.bf16.msra.mxu0 %v664
    %693 = vmatprep.subr.bf16.mxu0 0
    %694 = vmatpush1.bf16.msra.mxu0 %v663
    %695 = vmatprep.subr.bf16.mxu0 0
    %696 = vmatpush2.bf16.msra.mxu0 0
    %697 = vmatprep.subr.bf16.mxu0 0
    %698 = vmatpush2.bf16.msra.mxu0 0
    %699 = vmatprep.subr.bf16.mxu0 0
    %700 = vmatpush2.bf16.msra.mxu0 0
    %701 = vmatprep.subr.bf16.mxu0 0
    %702 = vmatpush2.bf16.msra.mxu0 0
    %703 = vmatprep.subr.bf16.mxu0 0
    %704 = vmatpush2.bf16.msra.mxu0 0
    %705 = vmatprep.subr.bf16.mxu0 0
    %706 = vmatpush2.bf16.msra.mxu0 0
    %707 = vmatprep.subr.bf16.mxu0 0
    %708 = vmatpush2.bf16.msra.mxu0 0
    %709 = vmatprep.subr.bf16.mxu0 0
    %710 = vmatpush2.bf16.msra.mxu0 0
    %711 = vmatprep.mubr.bf16.mxu0 0
    %712 = vmatmul.mubr.bf16.gmra.mxu0 %v624
    %v713 = vpop.f32.mrf.mxu0
    %v714 = vadd.f32 %v629, %v713
    %v715 = vpop.f32.mrf.mxu0
    %v716 = vpop.f32.mrf.mxu0
    %v717 = vpop.f32.mrf.mxu0
    %718 = vdwg.mxu0
    %v719 = vmax.f32 %v714, 0.0
    %v720 = vld [vmem:[#allocation13] sm:$0xf]
    %v721 = vld [vmem:[#allocation13 + $0x4] sm:$0xf]
    %v722 = vld [vmem:[#allocation13 + $0x8] sm:$0xf]
    %v723 = vld [vmem:[#allocation13 + $0xc] sm:$0xf]
    %v724 = vld [vmem:[#allocation13 + $0x10] sm:$0xf]
    %v725 = vld [vmem:[#allocation13 + $0x14] sm:$0xf]
    %v726 = vld [vmem:[#allocation13 + $0x18] sm:$0xf]
    %v727 = vld [vmem:[#allocation13 + $0x1c] sm:$0xf]
    %v728 = vld [vmem:[#allocation13 + $0x20] sm:$0xf]
    %v729 = vld [vmem:[#allocation13 + $0x24] sm:$0xf]
    %v730 = vld [vmem:[#allocation13 + $0x28] sm:$0xf]
    %v731 = vld [vmem:[#allocation13 + $0x2c] sm:$0xf]
    %v732 = vld [vmem:[#allocation13 + $0x30] sm:$0xf]
    %v733 = vld [vmem:[#allocation13 + $0x34] sm:$0xf]
    %v734 = vld [vmem:[#allocation13 + $0x38] sm:$0xf]
    %v735 = vld [vmem:[#allocation13 + $0x3c] sm:$0xf]
    %v736 = vld [vmem:[%s12] sm:$0x1]
    %v737 = vpack.c.bf16 %v719, %v719
    %v739 = vlaneseq
    %v740 = vshrl.u32 %v739, 7
    %v741 = vsub.s32 0, %v740
    %v742 = vrot.slane %v736, %v741
    %v760 = vunpack.c.l.b16 %v720
    %v761 = vunpack.c.l.b16 %v721
    %v762 = vunpack.c.l.b16 %v722
    %v763 = vunpack.c.l.b16 %v723
    %v764 = vunpack.c.l.b16 %v724
    %v765 = vunpack.c.l.b16 %v725
    %v766 = vunpack.c.l.b16 %v726
    %v767 = vunpack.c.l.b16 %v727
    %v768 = vunpack.c.l.b16 %v728
    %v769 = vunpack.c.l.b16 %v729
    %v770 = vunpack.c.l.b16 %v730
    %v771 = vunpack.c.l.b16 %v731
    %v772 = vunpack.c.l.b16 %v732
    %v773 = vunpack.c.l.b16 %v733
    %v774 = vunpack.c.l.b16 %v734
    %v775 = vunpack.c.l.b16 %v735
    %v776 = vpack.c.b16 %v761, %v760
    %v777 = vpack.c.b16 %v763, %v762
    %v778 = vpack.c.b16 %v765, %v764
    %v779 = vpack.c.b16 %v767, %v766
    %v780 = vpack.c.b16 %v769, %v768
    %v781 = vpack.c.b16 %v771, %v770
    %v782 = vpack.c.b16 %v773, %v772
    %v783 = vpack.c.b16 %v775, %v774
    %792 = vmatprep.subr.bf16.mxu0 0
    %793 = vmatpush1.bf16.msra.mxu0 %v783
    %794 = vmatprep.subr.bf16.mxu0 0
    %795 = vmatpush1.bf16.msra.mxu0 %v782
    %796 = vmatprep.subr.bf16.mxu0 0
    %797 = vmatpush1.bf16.msra.mxu0 %v781
    %798 = vmatprep.subr.bf16.mxu0 0
    %799 = vmatpush1.bf16.msra.mxu0 %v780
    %800 = vmatprep.subr.bf16.mxu0 0
    %801 = vmatpush1.bf16.msra.mxu0 %v779
    %802 = vmatprep.subr.bf16.mxu0 0
    %803 = vmatpush1.bf16.msra.mxu0 %v778
    %804 = vmatprep.subr.bf16.mxu0 0
    %805 = vmatpush1.bf16.msra.mxu0 %v777
    %806 = vmatprep.subr.bf16.mxu0 0
    %807 = vmatpush1.bf16.msra.mxu0 %v776
    %808 = vmatprep.subr.bf16.mxu0 0
    %809 = vmatpush2.bf16.msra.mxu0 0
    %810 = vmatprep.subr.bf16.mxu0 0
    %811 = vmatpush2.bf16.msra.mxu0 0
    %812 = vmatprep.subr.bf16.mxu0 0
    %813 = vmatpush2.bf16.msra.mxu0 0
    %814 = vmatprep.subr.bf16.mxu0 0
    %815 = vmatpush2.bf16.msra.mxu0 0
    %816 = vmatprep.subr.bf16.mxu0 0
    %817 = vmatpush2.bf16.msra.mxu0 0
    %818 = vmatprep.subr.bf16.mxu0 0
    %819 = vmatpush2.bf16.msra.mxu0 0
    %820 = vmatprep.subr.bf16.mxu0 0
    %821 = vmatpush2.bf16.msra.mxu0 0
    %822 = vmatprep.subr.bf16.mxu0 0
    %823 = vmatpush2.bf16.msra.mxu0 0
    %824 = vmatprep.mubr.bf16.mxu0 0
    %825 = vmatmul.mubr.bf16.gmra.mxu0 %v737
    %v826 = vpop.f32.mrf.mxu0
    %v827 = vadd.f32 %v742, %v826
    %v828 = vpop.f32.mrf.mxu0
    %v829 = vpop.f32.mrf.mxu0
    %v830 = vpop.f32.mrf.mxu0
    %831 = vdwg.mxu0
    %v832 = vmax.f32 %v827, 0.0
    %v833 = vld [vmem:[#allocation14] sm:$0xf]
    %v834 = vld [vmem:[#allocation14 + $0x4] sm:$0xf]
    %v835 = vld [vmem:[#allocation14 + $0x8] sm:$0xf]
    %v836 = vld [vmem:[#allocation14 + $0xc] sm:$0xf]
    %v837 = vld [vmem:[#allocation14 + $0x10] sm:$0xf]
    %v838 = vld [vmem:[#allocation14 + $0x14] sm:$0xf]
    %v839 = vld [vmem:[#allocation14 + $0x18] sm:$0xf]
    %v840 = vld [vmem:[#allocation14 + $0x1c] sm:$0xf]
    %v841 = vld [vmem:[#allocation14 + $0x20] sm:$0xf]
    %v842 = vld [vmem:[#allocation14 + $0x24] sm:$0xf]
    %v843 = vld [vmem:[#allocation14 + $0x28] sm:$0xf]
    %v844 = vld [vmem:[#allocation14 + $0x2c] sm:$0xf]
    %v845 = vld [vmem:[#allocation14 + $0x30] sm:$0xf]
    %v846 = vld [vmem:[#allocation14 + $0x34] sm:$0xf]
    %v847 = vld [vmem:[#allocation14 + $0x38] sm:$0xf]
    %v848 = vld [vmem:[#allocation14 + $0x3c] sm:$0xf]
    %v849 = vld [vmem:[%s14] sm:$0x1]
    %v850 = vpack.c.bf16 %v832, %v832
    %v852 = vlaneseq
    %v853 = vshrl.u32 %v852, 7
    %v854 = vsub.s32 0, %v853
    %v855 = vrot.slane %v849, %v854
    %v873 = vunpack.c.l.b16 %v833
    %v874 = vunpack.c.l.b16 %v834
    %v875 = vunpack.c.l.b16 %v835
    %v876 = vunpack.c.l.b16 %v836
    %v877 = vunpack.c.l.b16 %v837
    %v878 = vunpack.c.l.b16 %v838
    %v879 = vunpack.c.l.b16 %v839
    %v880 = vunpack.c.l.b16 %v840
    %v881 = vunpack.c.l.b16 %v841
    %v882 = vunpack.c.l.b16 %v842
    %v883 = vunpack.c.l.b16 %v843
    %v884 = vunpack.c.l.b16 %v844
    %v885 = vunpack.c.l.b16 %v845
    %v886 = vunpack.c.l.b16 %v846
    %v887 = vunpack.c.l.b16 %v847
    %v888 = vunpack.c.l.b16 %v848
    %v889 = vpack.c.b16 %v874, %v873
    %v890 = vpack.c.b16 %v876, %v875
    %v891 = vpack.c.b16 %v878, %v877
    %v892 = vpack.c.b16 %v880, %v879
    %v893 = vpack.c.b16 %v882, %v881
    %v894 = vpack.c.b16 %v884, %v883
    %v895 = vpack.c.b16 %v886, %v885
    %v896 = vpack.c.b16 %v888, %v887
    %905 = vmatprep.subr.bf16.mxu0 0
    %906 = vmatpush1.bf16.msra.mxu0 %v896
    %907 = vmatprep.subr.bf16.mxu0 0
    %908 = vmatpush1.bf16.msra.mxu0 %v895
    %909 = vmatprep.subr.bf16.mxu0 0
    %910 = vmatpush1.bf16.msra.mxu0 %v894
    %911 = vmatprep.subr.bf16.mxu0 0
    %912 = vmatpush1.bf16.msra.mxu0 %v893
    %913 = vmatprep.subr.bf16.mxu0 0
    %914 = vmatpush1.bf16.msra.mxu0 %v892
    %915 = vmatprep.subr.bf16.mxu0 0
    %916 = vmatpush1.bf16.msra.mxu0 %v891
    %917 = vmatprep.subr.bf16.mxu0 0
    %918 = vmatpush1.bf16.msra.mxu0 %v890
    %919 = vmatprep.subr.bf16.mxu0 0
    %920 = vmatpush1.bf16.msra.mxu0 %v889
    %921 = vmatprep.subr.bf16.mxu0 0
    %922 = vmatpush2.bf16.msra.mxu0 0
    %923 = vmatprep.subr.bf16.mxu0 0
    %924 = vmatpush2.bf16.msra.mxu0 0
    %925 = vmatprep.subr.bf16.mxu0 0
    %926 = vmatpush2.bf16.msra.mxu0 0
    %927 = vmatprep.subr.bf16.mxu0 0
    %928 = vmatpush2.bf16.msra.mxu0 0
    %929 = vmatprep.subr.bf16.mxu0 0
    %930 = vmatpush2.bf16.msra.mxu0 0
    %931 = vmatprep.subr.bf16.mxu0 0
    %932 = vmatpush2.bf16.msra.mxu0 0
    %933 = vmatprep.subr.bf16.mxu0 0
    %934 = vmatpush2.bf16.msra.mxu0 0
    %935 = vmatprep.subr.bf16.mxu0 0
    %936 = vmatpush2.bf16.msra.mxu0 0
    %937 = vmatprep.mubr.bf16.mxu0 0
    %938 = vmatmul.mubr.bf16.gmra.mxu0 %v850
    %v939 = vpop.f32.mrf.mxu0
    %v940 = vadd.f32 %v855, %v939
    %v941 = vpop.f32.mrf.mxu0
    %v942 = vpop.f32.mrf.mxu0
    %v943 = vpop.f32.mrf.mxu0
    %944 = vdwg.mxu0
    %v945 = vmax.f32 %v940, 0.0
    %v946 = vld [vmem:[#allocation16] sm:$0xf]
    %v947 = vld [vmem:[#allocation16 + $0x4] sm:$0xf]
    %v948 = vld [vmem:[#allocation16 + $0x8] sm:$0xf]
    %v949 = vld [vmem:[#allocation16 + $0xc] sm:$0xf]
    %v950 = vld [vmem:[#allocation16 + $0x10] sm:$0xf]
    %v951 = vld [vmem:[#allocation16 + $0x14] sm:$0xf]
    %v952 = vld [vmem:[#allocation16 + $0x18] sm:$0xf]
    %v953 = vld [vmem:[#allocation16 + $0x1c] sm:$0xf]
    %v954 = vld [vmem:[#allocation16 + $0x20] sm:$0xf]
    %v955 = vld [vmem:[#allocation16 + $0x24] sm:$0xf]
    %v956 = vld [vmem:[#allocation16 + $0x28] sm:$0xf]
    %v957 = vld [vmem:[#allocation16 + $0x2c] sm:$0xf]
    %v958 = vld [vmem:[#allocation16 + $0x30] sm:$0xf]
    %v959 = vld [vmem:[#allocation16 + $0x34] sm:$0xf]
    %v960 = vld [vmem:[#allocation16 + $0x38] sm:$0xf]
    %v961 = vld [vmem:[#allocation16 + $0x3c] sm:$0xf]
    %v962 = vld [vmem:[%s16] sm:$0x1]
    %v963 = vpack.c.bf16 %v945, %v945
    %v965 = vlaneseq
    %v966 = vshrl.u32 %v965, 7
    %v967 = vsub.s32 0, %v966
    %v968 = vrot.slane %v962, %v967
    %v986 = vunpack.c.l.b16 %v946
    %v987 = vunpack.c.l.b16 %v947
    %v988 = vunpack.c.l.b16 %v948
    %v989 = vunpack.c.l.b16 %v949
    %v990 = vunpack.c.l.b16 %v950
    %v991 = vunpack.c.l.b16 %v951
    %v992 = vunpack.c.l.b16 %v952
    %v993 = vunpack.c.l.b16 %v953
    %v994 = vunpack.c.l.b16 %v954
    %v995 = vunpack.c.l.b16 %v955
    %v996 = vunpack.c.l.b16 %v956
    %v997 = vunpack.c.l.b16 %v957
    %v998 = vunpack.c.l.b16 %v958
    %v999 = vunpack.c.l.b16 %v959
    %v1000 = vunpack.c.l.b16 %v960
    %v1001 = vunpack.c.l.b16 %v961
    %v1002 = vpack.c.b16 %v987, %v986
    %v1003 = vpack.c.b16 %v989, %v988
    %v1004 = vpack.c.b16 %v991, %v990
    %v1005 = vpack.c.b16 %v993, %v992
    %v1006 = vpack.c.b16 %v995, %v994
    %v1007 = vpack.c.b16 %v997, %v996
    %v1008 = vpack.c.b16 %v999, %v998
    %v1009 = vpack.c.b16 %v1001, %v1000
    %1018 = vmatprep.subr.bf16.mxu0 0
    %1019 = vmatpush1.bf16.msra.mxu0 %v1009
    %1020 = vmatprep.subr.bf16.mxu0 0
    %1021 = vmatpush1.bf16.msra.mxu0 %v1008
    %1022 = vmatprep.subr.bf16.mxu0 0
    %1023 = vmatpush1.bf16.msra.mxu0 %v1007
    %1024 = vmatprep.subr.bf16.mxu0 0
    %1025 = vmatpush1.bf16.msra.mxu0 %v1006
    %1026 = vmatprep.subr.bf16.mxu0 0
    %1027 = vmatpush1.bf16.msra.mxu0 %v1005
    %1028 = vmatprep.subr.bf16.mxu0 0
    %1029 = vmatpush1.bf16.msra.mxu0 %v1004
    %1030 = vmatprep.subr.bf16.mxu0 0
    %1031 = vmatpush1.bf16.msra.mxu0 %v1003
    %1032 = vmatprep.subr.bf16.mxu0 0
    %1033 = vmatpush1.bf16.msra.mxu0 %v1002
    %1034 = vmatprep.subr.bf16.mxu0 0
    %1035 = vmatpush2.bf16.msra.mxu0 0
    %1036 = vmatprep.subr.bf16.mxu0 0
    %1037 = vmatpush2.bf16.msra.mxu0 0
    %1038 = vmatprep.subr.bf16.mxu0 0
    %1039 = vmatpush2.bf16.msra.mxu0 0
    %1040 = vmatprep.subr.bf16.mxu0 0
    %1041 = vmatpush2.bf16.msra.mxu0 0
    %1042 = vmatprep.subr.bf16.mxu0 0
    %1043 = vmatpush2.bf16.msra.mxu0 0
    %1044 = vmatprep.subr.bf16.mxu0 0
    %1045 = vmatpush2.bf16.msra.mxu0 0
    %1046 = vmatprep.subr.bf16.mxu0 0
    %1047 = vmatpush2.bf16.msra.mxu0 0
    %1048 = vmatprep.subr.bf16.mxu0 0
    %1049 = vmatpush2.bf16.msra.mxu0 0
    %1050 = vmatprep.mubr.bf16.mxu0 0
    %1051 = vmatmul.mubr.bf16.gmra.mxu0 %v963
    %v1052 = vpop.f32.mrf.mxu0
    %v1053 = vadd.f32 %v968, %v1052
    %v1054 = vpop.f32.mrf.mxu0
    %v1055 = vpop.f32.mrf.mxu0
    %v1056 = vpop.f32.mrf.mxu0
    %1057 = vdwg.mxu0
    %v1058 = vmax.f32 %v1053, 0.0
    %v1059 = vld [vmem:[#allocation17] sm:$0xf]
    %v1060 = vld [vmem:[#allocation17 + $0x4] sm:$0xf]
    %v1061 = vld [vmem:[#allocation17 + $0x8] sm:$0xf]
    %v1062 = vld [vmem:[#allocation17 + $0xc] sm:$0xf]
    %v1063 = vld [vmem:[#allocation17 + $0x10] sm:$0xf]
    %v1064 = vld [vmem:[#allocation17 + $0x14] sm:$0xf]
    %v1065 = vld [vmem:[#allocation17 + $0x18] sm:$0xf]
    %v1066 = vld [vmem:[#allocation17 + $0x1c] sm:$0xf]
    %v1067 = vld [vmem:[#allocation17 + $0x20] sm:$0xf]
    %v1068 = vld [vmem:[#allocation17 + $0x24] sm:$0xf]
    %v1069 = vld [vmem:[#allocation17 + $0x28] sm:$0xf]
    %v1070 = vld [vmem:[#allocation17 + $0x2c] sm:$0xf]
    %v1071 = vld [vmem:[#allocation17 + $0x30] sm:$0xf]
    %v1072 = vld [vmem:[#allocation17 + $0x34] sm:$0xf]
    %v1073 = vld [vmem:[#allocation17 + $0x38] sm:$0xf]
    %v1074 = vld [vmem:[#allocation17 + $0x3c] sm:$0xf]
    %v1075 = vld [vmem:[%s18] sm:$0x1]
    %v1076 = vpack.c.bf16 %v1058, %v1058
    %v1078 = vlaneseq
    %v1079 = vshrl.u32 %v1078, 7
    %v1080 = vsub.s32 0, %v1079
    %v1081 = vrot.slane %v1075, %v1080
    %v1099 = vunpack.c.l.b16 %v1059
    %v1100 = vunpack.c.l.b16 %v1060
    %v1101 = vunpack.c.l.b16 %v1061
    %v1102 = vunpack.c.l.b16 %v1062
    %v1103 = vunpack.c.l.b16 %v1063
    %v1104 = vunpack.c.l.b16 %v1064
    %v1105 = vunpack.c.l.b16 %v1065
    %v1106 = vunpack.c.l.b16 %v1066
    %v1107 = vunpack.c.l.b16 %v1067
    %v1108 = vunpack.c.l.b16 %v1068
    %v1109 = vunpack.c.l.b16 %v1069
    %v1110 = vunpack.c.l.b16 %v1070
    %v1111 = vunpack.c.l.b16 %v1071
    %v1112 = vunpack.c.l.b16 %v1072
    %v1113 = vunpack.c.l.b16 %v1073
    %v1114 = vunpack.c.l.b16 %v1074
    %v1115 = vpack.c.b16 %v1100, %v1099
    %v1116 = vpack.c.b16 %v1102, %v1101
    %v1117 = vpack.c.b16 %v1104, %v1103
    %v1118 = vpack.c.b16 %v1106, %v1105
    %v1119 = vpack.c.b16 %v1108, %v1107
    %v1120 = vpack.c.b16 %v1110, %v1109
    %v1121 = vpack.c.b16 %v1112, %v1111
    %v1122 = vpack.c.b16 %v1114, %v1113
    %1131 = vmatprep.subr.bf16.mxu0 0
    %1132 = vmatpush1.bf16.msra.mxu0 %v1122
    %1133 = vmatprep.subr.bf16.mxu0 0
    %1134 = vmatpush1.bf16.msra.mxu0 %v1121
    %1135 = vmatprep.subr.bf16.mxu0 0
    %1136 = vmatpush1.bf16.msra.mxu0 %v1120
    %1137 = vmatprep.subr.bf16.mxu0 0
    %1138 = vmatpush1.bf16.msra.mxu0 %v1119
    %1139 = vmatprep.subr.bf16.mxu0 0
    %1140 = vmatpush1.bf16.msra.mxu0 %v1118
    %1141 = vmatprep.subr.bf16.mxu0 0
    %1142 = vmatpush1.bf16.msra.mxu0 %v1117
    %1143 = vmatprep.subr.bf16.mxu0 0
    %1144 = vmatpush1.bf16.msra.mxu0 %v1116
    %1145 = vmatprep.subr.bf16.mxu0 0
    %1146 = vmatpush1.bf16.msra.mxu0 %v1115
    %1147 = vmatprep.subr.bf16.mxu0 0
    %1148 = vmatpush2.bf16.msra.mxu0 0
    %1149 = vmatprep.subr.bf16.mxu0 0
    %1150 = vmatpush2.bf16.msra.mxu0 0
    %1151 = vmatprep.subr.bf16.mxu0 0
    %1152 = vmatpush2.bf16.msra.mxu0 0
    %1153 = vmatprep.subr.bf16.mxu0 0
    %1154 = vmatpush2.bf16.msra.mxu0 0
    %1155 = vmatprep.subr.bf16.mxu0 0
    %1156 = vmatpush2.bf16.msra.mxu0 0
    %1157 = vmatprep.subr.bf16.mxu0 0
    %1158 = vmatpush2.bf16.msra.mxu0 0
    %1159 = vmatprep.subr.bf16.mxu0 0
    %1160 = vmatpush2.bf16.msra.mxu0 0
    %1161 = vmatprep.subr.bf16.mxu0 0
    %1162 = vmatpush2.bf16.msra.mxu0 0
    %1163 = vmatprep.mubr.bf16.mxu0 0
    %1164 = vmatmul.mubr.bf16.gmra.mxu0 %v1076
    %v1165 = vpop.f32.mrf.mxu0
    %v1166 = vadd.f32 %v1081, %v1165
    %v1167 = vpop.f32.mrf.mxu0
    %v1168 = vpop.f32.mrf.mxu0
    %v1169 = vpop.f32.mrf.mxu0
    %1170 = vdwg.mxu0
    %v1171 = vxor.u32 %v1166, 2147483648
    %v1172 = vmul.f32 %v1171, 1.442695
    %v1173 = vpow.pop %v1172
    %v1174 = vadd.f32 %v1173, 1.0
    %v1175 = vrcp.pop %v1174
    %v1176 = vmul.f32 1.0, %v1175
    %1177 = vst [vmem:[#allocation19] sm:$0xff] %v1176
    // Predicated region
    $region118: #{tpu_custom_call.1} parent=1 // pred_check
      _
    $region119: #{tpu_custom_call.1} parent=1 // pred_check_branch
      %1179 = sbr.rel (0) target = $region121
    $region120: #{tpu_custom_call.1} parent=1 // pred_region
      %s1181 = ssub.s32 128, 128
      %1182 = vsyncadd [#allocation4], %s1181
      %s1184 = sshll.u32 [#allocation19], 4
      %s1185 = int_to_ptr.vmem [resolvable:$true] %s1184
      %1187 = dma.vmem_to_hbm [thread:$0]  %s1185, 128, %s19, [#allocation4]
    $region121: #{tpu_custom_call.1} parent=1 // pred_fallthru
      _
    // Predicated region
    $region122: #{tpu_custom_call.1} parent=1 // pred_check
      _
    $region123: #{tpu_custom_call.1} parent=1 // pred_check_branch
      %1189 = sbr.rel (0) target = $region125
    $region124: #{tpu_custom_call.1} parent=1 // pred_region
      %1190 = dma.done [#allocation4], 128
    $region125: #{tpu_custom_call.1} parent=1 // pred_fallthru
      _
    %1191 = vsyncpa [#allocation3], 1
    %1192 = vsyncpa [#allocation6], 1
    %1193 = vsyncpa [#allocation9], 1
    %1194 = vsyncpa [#allocation12], 1
    %1195 = vsyncpa [#allocation15], 1
    %1196 = vsyncpa [#allocation18], 1
    %1197 = vsyncpa [#allocation4], 1

</llo_original>
